<compile_context>
chip_gen: v7x
topology: tpu7x:2x2x1
jax: 0.10.0
libtpu: 0.0.40
codegen_flags: <defaults>
</compile_context>

<pallas_src>
import functools

import jax
import jax.numpy as jnp
from jax.experimental import pallas as pl
from jax.experimental.pallas import tpu as pltpu


# --------------------------------------------------------------------------------------
# Kernel
# --------------------------------------------------------------------------------------
def _triplet_loss_kernel(q_ref, s_ref, n_ref, o_ref, acc_ref, *,
                         margin, batch, tile_rows, tiles_per_split):
    c = pl.program_id(0)   # split ("parallel") axis -> megacore sharding on multi-TC chips
    j = pl.program_id(1)   # reduction ("arbitrary") axis within the split

    @pl.when(j == 0)
    def _init():
        acc_ref[0] = jnp.float32(0.0)

    q = q_ref[...]
    s = s_ref[...]
    n = n_ref[...]
    if q.dtype != jnp.float32:   # bf16 fast path: upcast only when needed
        q = q.astype(jnp.float32)
        s = s.astype(jnp.float32)
        n = n.astype(jnp.float32)

    # Rows beyond the true batch (ragged last tile / clamped dummy tile of split 1):
    #  * zero the differences BEFORE the sqrt so uninitialized padding can never
    #    produce Inf/NaN inside the reduction,
    #  * zero the hinge afterwards so padded rows contribute 0 (not `margin`).
    base = (c * tiles_per_split + j) * tile_rows
    row = base + jax.lax.broadcasted_iota(jnp.int32, (tile_rows, 1), 0)
    valid = row < batch

    dpos = jnp.where(valid, q - s, jnp.float32(0.0))
    dneg = jnp.where(valid, q - n, jnp.float32(0.0))

    # L2 distance over the embedding axis (torch.norm(..., p=2, dim=1)); plain sqrt, no eps,
    # exactly matching torch.norm on the forward pass.
    # TODO(synk): add eps or a custom VJP before differentiating through this kernel
    # (d/dx sqrt(0) is inf when anchor == positive).
    dp = jnp.sqrt(jnp.sum(dpos * dpos, axis=1, keepdims=True))
    dn = jnp.sqrt(jnp.sum(dneg * dneg, axis=1, keepdims=True))
    hinge = jnp.maximum(dp - dn + jnp.float32(margin), jnp.float32(0.0))
    hinge = jnp.where(valid, hinge, jnp.float32(0.0))

    # TODO(synk): if profiling on v7x with bf16 inputs shows compute exposed, switch this
    # SMEM-scalar reduce to a per-row VMEM accumulator (VALU adds per tile) and do the
    # single cross-sublane reduce only in _finalize; optionally deepen pipeline_mode.
    acc_ref[0] += jnp.sum(hinge)

    @pl.when(j == pl.num_programs(1) - 1)
    def _finalize():
        # Lane-dense (1, 8, 128) write of this split's partial sum (unmasked vst);
        # the wrapper reads lane 0 of each split and sums.
        o_ref[...] = jnp.full((1, 8, 128), acc_ref[0], dtype=jnp.float32)


# --------------------------------------------------------------------------------------
# Hardware queries (defensive: perf-only hints, never allowed to crash the wrapper)
# --------------------------------------------------------------------------------------
def _tpu_info():
    try:
        return pltpu.get_tpu_info()
    except Exception:
        return None


def _vmem_capacity_bytes():
    info = _tpu_info()
    if info is not None:
        try:
            v = int(getattr(info, "vmem_capacity_bytes"))
            if v > 0:
                return v
        except Exception:
            pass
    return 64 * 1024 * 1024   # conservative fallback (v7x floor): never over-budget


def _num_tensorcores():
    info = _tpu_info()
    if info is not None:
        for attr in ("num_cores", "cores_per_chip", "num_tensorcores", "tensorcore_count"):
            try:
                v = int(getattr(info, attr))
                if 0 < v <= 8:
                    return v
            except Exception:
                pass
    try:
        dev = jax.devices()[0]
        for attr in ("num_cores", "core_count"):
            v = getattr(dev, attr, None)
            if isinstance(v, int) and 0 < v <= 8:
                return v
        if "7" in str(getattr(dev, "device_kind", "")):
            return 2          # v7x: 2 TensorCores per chip
    except Exception:
        pass
    return 1                  # v5e / v6e: single TensorCore


# --------------------------------------------------------------------------------------
# Tiling
# --------------------------------------------------------------------------------------
def _sublane_multiple(dtype):
    # Native sublane packing: 8 rows for 4-byte dtypes, 16 for bf16/f16, 32 for int8/fp8.
    return max(8, 32 // jnp.dtype(dtype).itemsize)


def _pick_tile_rows(batch, dim, dtype, max_tile_rows):
    """Rows per tile: ~45% of physical VMEM split across 3 inputs x 2 pipeline buffers,
    rounded down to the dtype's native sublane multiple. No artificial row cap."""
    itemsize = jnp.dtype(dtype).itemsize
    sub = _sublane_multiple(dtype)
    budget = int(0.45 * _vmem_capacity_bytes())   # v5e/v6e ~57 MiB, v7x ~28 MiB
    tb = budget // (6 * dim * itemsize)
    tb = max(sub, (tb // sub) * sub)
    if max_tile_rows is not None:                 # testing / override knob only
        tb = max(sub, min(tb, (max_tile_rows // sub) * sub))
    if batch <= tb:
        return batch   # single tile: block dim equals the full array dim (always legal)
    return tb


# --------------------------------------------------------------------------------------
# Wrapper
# --------------------------------------------------------------------------------------
def triplet_loss(q_embed, s_embed, n_embed, margin=1.0, *,
                 max_tile_rows=None, num_splits=None):
    """Pallas TPU implementation of TripletLoss.forward for (B, D) embeddings.

    Inputs may be f32 or bf16. The kernel is HBM-bandwidth bound on every TPU
    generation, so callers should prefer bf16 embeddings (halves HBM traffic);
    all in-kernel math is done in f32 regardless.
    """
    assert q_embed.shape == s_embed.shape == n_embed.shape
    assert q_embed.ndim == 2
    B, D = q_embed.shape
    dtype = q_embed.dtype
    itemsize = jnp.dtype(dtype).itemsize

    tile_rows = _pick_tile_rows(B, D, dtype, max_tile_rows)
    num_tiles = pl.cdiv(B, tile_rows)
    if num_splits is None:
        # Only pay for the 2-way "parallel" split on multi-TensorCore chips (v7x);
        # on single-TC v5e/v6e it would only add a dummy clamped grid step.
        num_splits = 2 if (_num_tensorcores() >= 2 and num_tiles >= 2) else 1
    num_splits = max(1, min(int(num_splits), num_tiles))
    tiles_per_split = pl.cdiv(num_tiles, num_splits)

    kernel = functools.partial(
        _triplet_loss_kernel,
        margin=float(margin),
        batch=B,
        tile_rows=tile_rows,
        tiles_per_split=tiles_per_split,
    )

    if num_splits == 1:
        def in_map(c, j):
            return (j, 0)   # no clamp needed: j always indexes a real tile
    else:
        def in_map(c, j):
            # Clamp so the (at most one) dummy trailing step of the last split never DMAs
            # out of range; the in-kernel row mask zeroes its contribution.
            return (jnp.minimum(c * tiles_per_split + j, num_tiles - 1), 0)

    in_spec = pl.BlockSpec((tile_rows, D), in_map)

    # VMEM limit = actual working set (3 inputs x 2 pipeline buffers + output block)
    # + headroom; never request the full physical VMEM (compiler scratch needs room,
    # especially on v7x's 64 MiB per TC).
    working = 6 * tile_rows * D * itemsize + 2 * 8 * 128 * 4
    vmem_limit = min(int(working + 16 * 1024 * 1024),
                     _vmem_capacity_bytes() - 8 * 1024 * 1024)

    out = pl.pallas_call(
        kernel,
        out_shape=jax.ShapeDtypeStruct((num_splits, 8, 128), jnp.float32),
        grid_spec=pltpu.PrefetchScalarGridSpec(
            num_scalar_prefetch=0,
            grid=(num_splits, tiles_per_split),
            in_specs=[in_spec, in_spec, in_spec],
            out_specs=pl.BlockSpec((1, 8, 128), lambda c, j: (c, 0, 0)),
            scratch_shapes=[pltpu.SMEM((1,), jnp.float32)],
        ),
        compiler_params=pltpu.CompilerParams(
            dimension_semantics=("parallel", "arbitrary"),
            vmem_limit_bytes=vmem_limit,
        ),
        cost_estimate=pl.CostEstimate(
            flops=8 * B * D,
            transcendentals=2 * B,
            bytes_accessed=3 * B * D * itemsize + num_splits * 8 * 128 * 4,
        ),
    )(q_embed, s_embed, n_embed)

    # Sum the per-split partial hinge sums, divide once by the true batch size.
    return jnp.sum(out[:, 0, 0]) / jnp.float32(B)


# --------------------------------------------------------------------------------------
# Reference + tests
# --------------------------------------------------------------------------------------
def _triplet_loss_ref(q, s, n, margin=1.0):
    q, s, n = (x.astype(jnp.float32) for x in (q, s, n))
    dp = jnp.sqrt(jnp.sum((q - s) ** 2, axis=1))
    dn = jnp.sqrt(jnp.sum((q - n) ** 2, axis=1))
    return jnp.mean(jnp.maximum(dp - dn + margin, 0.0))


if __name__ == "__main__":
    key = jax.random.PRNGKey(0)
    kq, ks, kn = jax.random.split(key, 3)

    # Base path: small (B, D) batch of embeddings (single tile, single split).
    B, D = 8, 32
    q = jax.random.normal(kq, (B, D), dtype=jnp.float32)
    s = jax.random.normal(ks, (B, D), dtype=jnp.float32)
    n = jax.random.normal(kn, (B, D), dtype=jnp.float32)
    loss = triplet_loss(q, s, n, margin=1.0)
    jax.block_until_ready(loss)
    ref = _triplet_loss_ref(q, s, n, margin=1.0)
    assert jnp.allclose(loss, ref, rtol=1e-5, atol=1e-5), (loss, ref)

    # Tiled + masked + 2-split path: ragged batch forced through multiple tiles and both
    # grid splits (exercises the clamp / row-mask logic regardless of chip core count).
    B2, D2 = 40, 32
    k2 = jax.random.split(jax.random.PRNGKey(1), 3)
    q2 = jax.random.normal(k2[0], (B2, D2), dtype=jnp.float32)
    s2 = jax.random.normal(k2[1], (B2, D2), dtype=jnp.float32)
    n2 = jax.random.normal(k2[2], (B2, D2), dtype=jnp.float32)
    loss2 = triplet_loss(q2, s2, n2, margin=1.0, max_tile_rows=16, num_splits=2)
    jax.block_until_ready(loss2)
    ref2 = _triplet_loss_ref(q2, s2, n2, margin=1.0)
    assert jnp.allclose(loss2, ref2, rtol=1e-5, atol=1e-5), (loss2, ref2)

    # bf16 fast path (preferred caller contract: halves HBM traffic; f32 math inside).
    q3, s3, n3 = (x.astype(jnp.bfloat16) for x in (q2, s2, n2))
    loss3 = triplet_loss(q3, s3, n3, margin=1.0, max_tile_rows=16)
    jax.block_until_ready(loss3)
    ref3 = _triplet_loss_ref(q3, s3, n3, margin=1.0)
    assert jnp.allclose(loss3, ref3, rtol=1e-4, atol=1e-4), (loss3, ref3)

    print("KERNEL_OK")
</pallas_src>

<mosaic_0001>
module attributes {stable_mosaic.version = 11 : i64} {
  func.func @_triplet_loss_kernel(%arg0: i32, %arg1: i32, %arg2: memref<8x32xf32, #tpu.memory_space<vmem>>, %arg3: memref<8x32xf32, #tpu.memory_space<vmem>>, %arg4: memref<8x32xf32, #tpu.memory_space<vmem>>, %arg5: memref<1x8x128xf32, #tpu.memory_space<vmem>>, %arg6: memref<1xf32, #tpu.memory_space<smem>>) attributes {dimension_semantics = [#tpu.dimension_semantics<parallel>, #tpu.dimension_semantics<arbitrary>], iteration_bounds = array<i64: 1, 1>, scalar_prefetch = 0 : i64, scratch_operands = 1 : i64, tpu.core_type = #tpu.core_type<tc>, window_params = [{transform_indices = @transform_0, window_bounds = array<i64: 8, 32>}, {transform_indices = @transform_1, window_bounds = array<i64: 8, 32>}, {transform_indices = @transform_2, window_bounds = array<i64: 8, 32>}, {transform_indices = @transform_3, window_bounds = array<i64: 1, 8, 128>}]} {
    %c0_i32 = arith.constant 0 : i32
    %0 = arith.cmpi eq, %arg1, %c0_i32 : i32
    %1 = arith.extui %0 : i1 to i32
    %c0_i32_0 = arith.constant 0 : i32
    %2 = arith.cmpi ne, %1, %c0_i32_0 : i32
    scf.if %2 {
      %cst_18 = arith.constant 0.000000e+00 : f32
      %c0_19 = arith.constant 0 : index
      %49 = memref.load %arg6[%c0_19] : memref<1xf32, #tpu.memory_space<smem>>
      memref.store %cst_18, %arg6[%c0_19] : memref<1xf32, #tpu.memory_space<smem>>
    } else {
    }
    %c0 = arith.constant 0 : index
    %c0_1 = arith.constant 0 : index
    %3 = vector.load %arg2[%c0, %c0_1] : memref<8x32xf32, #tpu.memory_space<vmem>>, vector<8x32xf32>
    %c0_2 = arith.constant 0 : index
    %c0_3 = arith.constant 0 : index
    %4 = vector.load %arg3[%c0_2, %c0_3] : memref<8x32xf32, #tpu.memory_space<vmem>>, vector<8x32xf32>
    %c0_4 = arith.constant 0 : index
    %c0_5 = arith.constant 0 : index
    %5 = vector.load %arg4[%c0_4, %c0_5] : memref<8x32xf32, #tpu.memory_space<vmem>>, vector<8x32xf32>
    %c1_i32 = arith.constant 1 : i32
    %6 = arith.muli %arg0, %c1_i32 : i32
    %7 = arith.addi %6, %arg1 : i32
    %c8_i32 = arith.constant 8 : i32
    %8 = arith.muli %7, %c8_i32 : i32
    %9 = tpu.iota {dimensions = array<i32: 0>} : vector<8x1xi32>
    %10 = vector.broadcast %8 : i32 to vector<8x1xi32>
    %11 = arith.addi %10, %9 : vector<8x1xi32>
    %c8_i32_6 = arith.constant 8 : i32
    %12 = vector.broadcast %c8_i32_6 : i32 to vector<8x1xi32>
    %13 = arith.cmpi slt, %11, %12 : vector<8x1xi32>
    %14 = arith.subf %3, %4 : vector<8x32xf32>
    %cst = arith.constant 0.000000e+00 : f32
    %15 = vector.shape_cast %13 : vector<8x1xi1> to vector<8x1xi1>
    %16 = vector.broadcast %15 : vector<8x1xi1> to vector<8x32xi1>
    %17 = vector.broadcast %cst : f32 to vector<8x32xf32>
    %18 = arith.select %16, %14, %17 : vector<8x32xi1>, vector<8x32xf32>
    %19 = arith.subf %3, %5 : vector<8x32xf32>
    %cst_7 = arith.constant 0.000000e+00 : f32
    %20 = vector.shape_cast %13 : vector<8x1xi1> to vector<8x1xi1>
    %21 = vector.broadcast %20 : vector<8x1xi1> to vector<8x32xi1>
    %22 = vector.broadcast %cst_7 : f32 to vector<8x32xf32>
    %23 = arith.select %21, %19, %22 : vector<8x32xi1>, vector<8x32xf32>
    %24 = arith.mulf %18, %18 : vector<8x32xf32>
    %cst_8 = arith.constant dense<0.000000e+00> : vector<8xf32>
    %25 = vector.multi_reduction <add>, %24, %cst_8 [1] : vector<8x32xf32> to vector<8xf32>
    %26 = vector.shape_cast %25 : vector<8xf32> to vector<8x1xf32>
    %27 = math.sqrt %26 : vector<8x1xf32>
    %28 = arith.mulf %23, %23 : vector<8x32xf32>
    %cst_9 = arith.constant dense<0.000000e+00> : vector<8xf32>
    %29 = vector.multi_reduction <add>, %28, %cst_9 [1] : vector<8x32xf32> to vector<8xf32>
    %30 = vector.shape_cast %29 : vector<8xf32> to vector<8x1xf32>
    %31 = math.sqrt %30 : vector<8x1xf32>
    %32 = arith.subf %27, %31 : vector<8x1xf32>
    %cst_10 = arith.constant 1.000000e+00 : f32
    %33 = vector.broadcast %cst_10 : f32 to vector<8x1xf32>
    %34 = arith.addf %32, %33 : vector<8x1xf32>
    %cst_11 = arith.constant 0.000000e+00 : f32
    %35 = vector.broadcast %cst_11 : f32 to vector<8x1xf32>
    %36 = arith.maximumf %34, %35 : vector<8x1xf32>
    %cst_12 = arith.constant 0.000000e+00 : f32
    %37 = vector.broadcast %cst_12 : f32 to vector<8x1xf32>
    %38 = arith.select %13, %36, %37 : vector<8x1xi1>, vector<8x1xf32>
    %c0_13 = arith.constant 0 : index
    %39 = memref.load %arg6[%c0_13] : memref<1xf32, #tpu.memory_space<smem>>
    %40 = vector.shape_cast %38 : vector<8x1xf32> to vector<1x8x1xf32>
    %cst_14 = arith.constant dense<0.000000e+00> : vector<1xf32>
    %41 = vector.multi_reduction <add>, %40, %cst_14 [1, 2] : vector<1x8x1xf32> to vector<1xf32>
    %42 = vector.shape_cast %41 : vector<1xf32> to vector<1x1x1xf32>
    %43 = vector.extract %42[0, 0, 0] : f32 from vector<1x1x1xf32>
    %44 = arith.addf %39, %43 : f32
    %c0_15 = arith.constant 0 : index
    %45 = memref.load %arg6[%c0_15] : memref<1xf32, #tpu.memory_space<smem>>
    memref.store %44, %arg6[%c0_15] : memref<1xf32, #tpu.memory_space<smem>>
    %c0_i32_16 = arith.constant 0 : i32
    %46 = arith.cmpi eq, %arg1, %c0_i32_16 : i32
    %47 = arith.extui %46 : i1 to i32
    %c0_i32_17 = arith.constant 0 : i32
    %48 = arith.cmpi ne, %47, %c0_i32_17 : i32
    scf.if %48 {
      %c0_18 = arith.constant 0 : index
      %49 = memref.load %arg6[%c0_18] : memref<1xf32, #tpu.memory_space<smem>>
      %50 = vector.broadcast %49 : f32 to vector<1x8x128xf32>
      %c0_19 = arith.constant 0 : index
      %c0_20 = arith.constant 0 : index
      %c0_21 = arith.constant 0 : index
      %51 = vector.load %arg5[%c0_19, %c0_20, %c0_21] : memref<1x8x128xf32, #tpu.memory_space<vmem>>, vector<1x8x128xf32>
      tpu.vector_store %arg5[%c0_19, %c0_20, %c0_21], %50 {strides = array<i32>} : memref<1x8x128xf32, #tpu.memory_space<vmem>>, vector<1x8x128xf32>,
    } else {
    }
    return
  }
  func.func @transform_0(%arg0: i32, %arg1: i32) -> (i32, i32) {
    %c0_i32 = arith.constant 0 : i32
    %c0_i32_0 = arith.constant 0 : i32
    return %arg1, %c0_i32 : i32, i32
  }
  func.func @transform_1(%arg0: i32, %arg1: i32) -> (i32, i32) {
    %c0_i32 = arith.constant 0 : i32
    %c0_i32_0 = arith.constant 0 : i32
    return %arg1, %c0_i32 : i32, i32
  }
  func.func @transform_2(%arg0: i32, %arg1: i32) -> (i32, i32) {
    %c0_i32 = arith.constant 0 : i32
    %c0_i32_0 = arith.constant 0 : i32
    return %arg1, %c0_i32 : i32, i32
  }
  func.func @transform_3(%arg0: i32, %arg1: i32) -> (i32, i32, i32) {
    %c0_i32 = arith.constant 0 : i32
    %c0_i32_0 = arith.constant 0 : i32
    %c0_i32_1 = arith.constant 0 : i32
    return %arg0, %c0_i32, %c0_i32_0 : i32, i32, i32
  }
}

</mosaic_0001>

<llo_original>
// kernel: tpu_custom_call.1
$region0: #{tpu_custom_call.1}
  #allocation0 [shape = 'u32[]', space=smem, size = 0x4, offset = 0x4, fixed_abs, tag = 'smem constant byte address 0x4 - core index']
  #allocation1 [shape = 'u32[144,128]{1,0:T(1,128)}', space=vmem, size = 0x12000, scoped, tag = 'internal scratch']
  #allocation2 [shape = 'f32[1]{0:T(128)}', space=smem, size = 0x200, scoped, tag = 'scratch operand']
  %s0 = inlined_call_operand.hbm [shape: f32[8,32], index: 0, kind: input, shape index: {}]
  %s1 = inlined_call_operand.hbm [shape: f32[8,32], index: 1, kind: input, shape index: {}]
  %s2 = inlined_call_operand.hbm [shape: f32[8,32], index: 2, kind: input, shape index: {}]
  %s3 = inlined_call_operand.hbm [shape: f32[1,8,128], index: 3, kind: output, shape index: {}]
  %s4 = sld [smem:[#allocation0]]
  $region42: #{tpu_custom_call.1} parent=0
    _
  %s6 = ssub.s32 1, %s4
  %s7 = scalar_select 0, %s6, %s4
  $region1: #{tpu_custom_call.1} parent=0
    #allocation3 [shape = 'u8[4096]{0}', space=vmem, size = 0x1000, scoped, tag = 'input window, operand 0, single buffered']
    #allocation4 [shape = 's32[1]{0}', space=sflag, size = 0x4, scoped, tag = 'scoped memory for tpu_custom_call.1']
    #allocation5 [shape = 's32[1]{0}', space=sflag, size = 0x4, scoped, tag = 'scoped memory for tpu_custom_call.1']
    #allocation6 [shape = 'u8[4096]{0}', space=vmem, size = 0x1000, scoped, tag = 'input window, operand 1, single buffered']
    #allocation7 [shape = 's32[1]{0}', space=sflag, size = 0x4, scoped, tag = 'scoped memory for tpu_custom_call.1']
    #allocation8 [shape = 'u8[4096]{0}', space=vmem, size = 0x1000, scoped, tag = 'input window, operand 2, single buffered']
    #allocation9 [shape = 'u8[4096]{0}', space=vmem, size = 0x1000, scoped, tag = 'output window, operand 0, single buffered']
    %8 = vsyncpa [#allocation4], 0
    %9 = vsyncpa [#allocation7], 0
    %10 = vsyncpa [#allocation5], 0
    // Predicated region
    $region2: #{tpu_custom_call.1} parent=1 // pred_check
      _
    $region3: #{tpu_custom_call.1} parent=1 // pred_check_branch
      %12 = sbr.rel (0) target = $region5
    $region4: #{tpu_custom_call.1} parent=1 // pred_region
      %s14 = ssub.s32 128, 128
      %15 = vsyncadd [#allocation4], %s14
      %s17 = sshll.u32 [#allocation3], 4
      %s18 = int_to_ptr.vmem [resolvable:$true] %s17
      %20 = dma.hbm_to_vmem [thread:$0]  %s0, 128, %s18, [#allocation4]
    $region5: #{tpu_custom_call.1} parent=1 // pred_fallthru
      _
    // Predicated region
    $region6: #{tpu_custom_call.1} parent=1 // pred_check
      _
    $region7: #{tpu_custom_call.1} parent=1 // pred_check_branch
      %22 = sbr.rel (0) target = $region9
    $region8: #{tpu_custom_call.1} parent=1 // pred_region
      %s24 = ssub.s32 128, 128
      %25 = vsyncadd [#allocation7], %s24
      %s27 = sshll.u32 [#allocation6], 4
      %s28 = int_to_ptr.vmem [resolvable:$true] %s27
      %30 = dma.hbm_to_vmem [thread:$0]  %s1, 128, %s28, [#allocation7]
    $region9: #{tpu_custom_call.1} parent=1 // pred_fallthru
      _
    // Predicated region
    $region10: #{tpu_custom_call.1} parent=1 // pred_check
      _
    $region11: #{tpu_custom_call.1} parent=1 // pred_check_branch
      %32 = sbr.rel (0) target = $region13
    $region12: #{tpu_custom_call.1} parent=1 // pred_region
      %s34 = ssub.s32 128, 128
      %35 = vsyncadd [#allocation7], %s34
      %s37 = sshll.u32 [#allocation8], 4
      %s38 = int_to_ptr.vmem [resolvable:$true] %s37
      %40 = dma.hbm_to_vmem [thread:$0]  %s2, 128, %s38, [#allocation7]
    $region13: #{tpu_custom_call.1} parent=1 // pred_fallthru
      _
    // Predicated region
    $region14: #{tpu_custom_call.1} parent=1 // pred_check
      _
    $region15: #{tpu_custom_call.1} parent=1 // pred_check_branch
      %42 = sbr.rel (0) target = $region17
    $region16: #{tpu_custom_call.1} parent=1 // pred_region
      %43 = dma.done [#allocation4], 128
    $region17: #{tpu_custom_call.1} parent=1 // pred_fallthru
      _
    // Predicated region
    $region18: #{tpu_custom_call.1} parent=1 // pred_check
      _
    $region19: #{tpu_custom_call.1} parent=1 // pred_check_branch
      %45 = sbr.rel (0) target = $region21
    $region20: #{tpu_custom_call.1} parent=1 // pred_region
      %46 = dma.done [#allocation7], 128
    $region21: #{tpu_custom_call.1} parent=1 // pred_fallthru
      _
    // Predicated region
    $region22: #{tpu_custom_call.1} parent=1 // pred_check
      _
    $region23: #{tpu_custom_call.1} parent=1 // pred_check_branch
      %48 = sbr.rel (0) target = $region25
    $region24: #{tpu_custom_call.1} parent=1 // pred_region
      %49 = dma.done [#allocation7], 128
    $region25: #{tpu_custom_call.1} parent=1 // pred_fallthru
      _
    %p50 = scmp.eq.s32.totalorder 0, 0
    // Predicated region
    $region26: #{tpu_custom_call.1} parent=1 // pred_check
      %p51 = pneg %p50
    $region27: #{tpu_custom_call.1} parent=1 // pred_check_branch
      %53 = sbr.rel (%p51) target = $region29
    $region28: #{tpu_custom_call.1} parent=1 // pred_region
      %s54 = scalar_lea.smem [#allocation2], 0
      %55 = sst [smem:[%s54]] 0.0
    $region29: #{tpu_custom_call.1} parent=1 // pred_fallthru
      _
    %v56 = vld [vmem:[#allocation3] sm:$0xff]
    %v57 = vld [vmem:[#allocation6] sm:$0xff]
    %v58 = vld [vmem:[#allocation8] sm:$0xff]
    %s59 = sadd.s32 0, 0
    %s60 = smul.u32 %s59, 8
    %v61 = vlaneseq
    %v62 = vshrl.u32 %v61, 7
    %v63 = vstv %s60
    %v64 = vadd.s32 %v63, %v62
    %vm65 = vcmp.lt.s32.totalorder %v64, 8
    %v66 = vsub.f32 %v56, %v57
    %v67 = vsel %vm65, 1, 0
    %vm68 = vcmp.eq.s32.totalorder %v67, 1
    %v69 = vsel %vm68, %v66, 0.0
    %v70 = vsub.f32 %v56, %v58
    %v71 = vsel %vm68, %v70, 0.0
    %v72 = vmul.f32 %v69, %v69
    %vm73 = vcmask 261120
    %v74 = vsel %vm73, %v72, 0.0
    %75 = vadd.xlane.f32.xlu0 %v74
    %v76 = vpop.xlane.xlu0 %75
    %v77 = vrsqrt.pop %v76
    %v78 = vmul.f32 %v76, %v77
    %vm79 = vcmp.eq.f32.partialorder %v76, inf
    %v80 = vsel %vm79, %v76, %v78
    %vm81 = vcmp.eq.f32.partialorder %v76, 0.0
    %v82 = vand.u32 %v76, 2147483648
    %v83 = vsel %vm81, %v82, %v80
    %v84 = vmul.f32 %v71, %v71
    %v85 = vsel %vm73, %v84, 0.0
    %86 = vadd.xlane.f32.xlu0 %v85
    %v87 = vpop.xlane.xlu0 %86
    %v88 = vrsqrt.pop %v87
    %v89 = vmul.f32 %v87, %v88
    %vm90 = vcmp.eq.f32.partialorder %v87, inf
    %v91 = vsel %vm90, %v87, %v89
    %vm92 = vcmp.eq.f32.partialorder %v87, 0.0
    %v93 = vand.u32 %v87, 2147483648
    %v94 = vsel %vm92, %v93, %v91
    %v95 = vsub.f32 %v83, %v94
    %v96 = vadd.f32 %v95, 1.0
    %v97 = vmax.f32 %v96, 0.0
    %v98 = vsel %vm65, %v97, 0.0
    %s99 = sld [smem:[#allocation2]]
    %vm100 = vcmask 7168
    %v101 = vsel %vm100, %v98, 0.0
    %102 = vadd.xlane.f32.xlu0 %v101
    %v103 = vpop.xlane.xlu0 %102
    %v104 = vrot.slane %v103, 4
    %v105 = vadd.f32 %v103, %v104
    %v106 = vrot.slane %v105, 2
    %v107 = vadd.f32 %v105, %v106
    %v108 = vrot.slane %v107, 1
    %v109 = vadd.f32 %v107, %v108
    %s110 = vtos %v109
    %s111 = sadd.f32 %s99, %s110
    %s112 = scalar_lea.smem [#allocation2], 0
    %113 = sst [smem:[%s112]] %s111
    // Predicated region
    $region30: #{tpu_custom_call.1} parent=1 // pred_check
      %p114 = pneg %p50
    $region31: #{tpu_custom_call.1} parent=1 // pred_check_branch
      %116 = sbr.rel (%p114) target = $region33
    $region32: #{tpu_custom_call.1} parent=1 // pred_region
      %s117 = sld [smem:[#allocation2]]
      %v118 = vstv %s117
      %119 = vst [vmem:[#allocation9] sm:$0xff] %v118
    $region33: #{tpu_custom_call.1} parent=1 // pred_fallthru
      _
    // Predicated region
    $region34: #{tpu_custom_call.1} parent=1 // pred_check
      _
    $region35: #{tpu_custom_call.1} parent=1 // pred_check_branch
      %121 = sbr.rel (0) target = $region37
    $region36: #{tpu_custom_call.1} parent=1 // pred_region
      %s123 = ssub.s32 128, 128
      %124 = vsyncadd [#allocation5], %s123
      %s126 = sshll.u32 [#allocation9], 4
      %s127 = int_to_ptr.vmem [resolvable:$true] %s126
      %129 = dma.vmem_to_hbm [thread:$0]  %s127, 128, %s3, [#allocation5]
    $region37: #{tpu_custom_call.1} parent=1 // pred_fallthru
      _
    // Predicated region
    $region38: #{tpu_custom_call.1} parent=1 // pred_check
      _
    $region39: #{tpu_custom_call.1} parent=1 // pred_check_branch
      %131 = sbr.rel (0) target = $region41
    $region40: #{tpu_custom_call.1} parent=1 // pred_region
      %132 = dma.done [#allocation5], 128
    $region41: #{tpu_custom_call.1} parent=1 // pred_fallthru
      _
    %133 = vsyncpa [#allocation4], 1
    %134 = vsyncpa [#allocation7], 1
    %135 = vsyncpa [#allocation5], 1

</llo_original>
